<compile_context>
chip_gen: v6e
topology: v6e:2x2x1
jax: 0.10.0
libtpu: 0.0.40
codegen_flags: <defaults>
</compile_context>

<pallas_src>
import functools

import jax
import jax.numpy as jnp
from jax.experimental import pallas as pl
from jax.experimental.pallas import tpu as pltpu


def _round_up(x, m):
    return ((x + m - 1) // m) * m


def _patch_embed_kernel(x_ref, w_ref, b_ref, o_ref):
    # x_ref: (tm, K) patches, w_ref: (K, E), b_ref: (1, E) f32, o_ref: (tm, E).
    # MXU matmul with f32 accumulator; bias add rides a spare VALU slot under
    # the MXU push; final cast only at the store.
    acc = jnp.dot(x_ref[...], w_ref[...], preferred_element_type=jnp.float32)
    o_ref[...] = (acc + b_ref[...]).astype(o_ref.dtype)


@functools.partial(
    jax.jit,
    static_argnames=("tm", "out_dtype", "compute_dtype", "vmem_budget_bytes"))
def patch_embed_forward(x, weight, bias, *, tm=1024, out_dtype=None,
                        compute_dtype=jnp.bfloat16,
                        vmem_budget_bytes=12 * 1024 * 1024):
    """PatchEmbed forward.

    x: (B, C, H, W); weight: (E, C, p, p) Conv2d weight; bias: (E,).
    Returns (B, Hp*Wp, E) == proj(x).flatten(2).transpose(1, 2).

    compute_dtype=jnp.float32 gives bit-parity-style numerics with the f32
    conv; the default bf16 is the native MXU input type.
    """
    B, C, H, W = x.shape
    E, _, p, _ = weight.shape
    Hp, Wp = H // p, W // p
    num_patches = Hp * Wp
    out_dtype = x.dtype if out_dtype is None else out_dtype

    assert tm >= 16 and tm % 16 == 0, "tm must be a positive multiple of 16"

    # ---- patchify glue: one fused XLA HBM pass, cast folded into it ----------
    # TODO(synk): fuse the NCHW -> (M, K) patchify into the kernel via a
    # BlockSpec over raw x; the required 5-D (hp, wp, c, i, j) transpose does
    # not lower cleanly through Mosaic today, so it stays as a single XLA
    # reshape/transpose pass (writing bf16, not f32, to halve that stream).
    patches = x.astype(compute_dtype).reshape(B, C, Hp, p, Wp, p)
    patches = patches.transpose(0, 2, 4, 1, 3, 5).reshape(B * num_patches,
                                                          C * p * p)
    w_mat = jnp.transpose(weight.reshape(E, C * p * p)).astype(compute_dtype)
    b_2d = bias.astype(jnp.float32).reshape(1, E)

    M, K = patches.shape
    cmp_isz = jnp.dtype(compute_dtype).itemsize
    out_isz = jnp.dtype(out_dtype).itemsize

    # ---- pick the M tile ------------------------------------------------------
    # Double-buffered streams: patches-in + out; resident: weight + bias (x2
    # default buffers).  Cap tm so the sum fits the VMEM budget.
    per_row = K * cmp_isz + E * out_isz
    resident = 2 * (K * E * cmp_isz + E * 4)
    tm_cap = max(16, ((vmem_budget_bytes - resident) // (2 * per_row)) // 16 * 16)
    tm_ = min(tm, tm_cap, _round_up(M, 16))
    # Prefer a tile that divides M exactly (avoids padding + the post-kernel
    # depad pass over the output); only accept divisors >= tm_/2 so the
    # per-grid-step overhead stays negligible.
    if M % tm_ != 0 and M % 16 == 0:
        for cand in range(tm_ - 16, max(tm_ // 2, 16) - 1, -16):
            if M % cand == 0:
                tm_ = cand
                break
    M_pad = _round_up(M, tm_)
    if M_pad != M:
        patches = jnp.pad(patches, ((0, M_pad - M), (0, 0)))

    cost = pl.CostEstimate(
        flops=2 * M_pad * K * E,
        transcendentals=0,
        bytes_accessed=(M_pad * K * cmp_isz + K * E * cmp_isz + E * 4
                        + M_pad * E * out_isz),
    )

    out = pl.pallas_call(
        _patch_embed_kernel,
        out_shape=jax.ShapeDtypeStruct((M_pad, E), out_dtype),
        grid=(M_pad // tm_,),
        in_specs=[
            pl.BlockSpec((tm_, K), lambda m: (m, 0)),   # patches: streamed once
            pl.BlockSpec((K, E), lambda m: (0, 0)),     # weight: VMEM-resident
            pl.BlockSpec((1, E), lambda m: (0, 0)),     # bias:   VMEM-resident
        ],
        out_specs=pl.BlockSpec((tm_, E), lambda m: (m, 0)),
        compiler_params=pltpu.CompilerParams(
            dimension_semantics=("parallel",)),
        cost_estimate=cost,
    )(patches, w_mat, b_2d)

    if M_pad != M:
        out = out[:M]
    return out.reshape(B, num_patches, E)


if __name__ == "__main__":
    # Small shapes consistent with the module: img_size=16, patch_size=4,
    # in_chans=4, embed_dim=32  ->  x: (2, 4, 16, 16), out: (2, 16, 32)
    B, C, H, W = 2, 4, 16, 16
    patch_size = 4
    embed_dim = 32

    key = jax.random.PRNGKey(0)
    kx, kw, kb = jax.random.split(key, 3)
    x = jax.random.normal(kx, (B, C, H, W), dtype=jnp.float32)
    # Deterministic synthetic Conv2d params (shapes from nn.Conv2d(C, E, p, p)).
    weight = jax.random.normal(kw, (embed_dim, C, patch_size, patch_size),
                               dtype=jnp.float32) * 0.02
    bias = jax.random.normal(kb, (embed_dim,), dtype=jnp.float32) * 0.02

    out = patch_embed_forward(x, weight, bias)
    out = jax.block_until_ready(out)

    # Reference check against XLA conv (same semantics as the PyTorch module).
    ref = jax.lax.conv_general_dilated(
        x, weight, window_strides=(patch_size, patch_size), padding="VALID",
        dimension_numbers=("NCHW", "OIHW", "NCHW"))
    ref = ref + bias.reshape(1, embed_dim, 1, 1)
    ref = ref.reshape(B, embed_dim, -1).transpose(0, 2, 1)

    assert out.shape == (B, (H // patch_size) * (W // patch_size), embed_dim)
    # bf16 inputs with f32 accumulation -> relaxed tolerance vs the f32 conv.
    assert jnp.allclose(out, ref, atol=2e-2, rtol=2e-2), \
        float(jnp.max(jnp.abs(out - ref)))

    print("KERNEL_OK")
</pallas_src>

<mosaic_0001>
module attributes {stable_mosaic.version = 11 : i64} {
  func.func @_patch_embed_kernel(%arg0: i32, %arg1: memref<32x64xbf16, #tpu.memory_space<vmem>>, %arg2: memref<64x32xbf16, #tpu.memory_space<vmem>>, %arg3: memref<1x32xf32, #tpu.memory_space<vmem>>, %arg4: memref<32x32xf32, #tpu.memory_space<vmem>>) attributes {dimension_semantics = [#tpu.dimension_semantics<parallel>], iteration_bounds = array<i64: 1>, scalar_prefetch = 0 : i64, scratch_operands = 0 : i64, tpu.core_type = #tpu.core_type<tc>, window_params = [{transform_indices = @transform_0, window_bounds = array<i64: 32, 64>}, {pipeline_mode = #tpu.pipeline_mode<synchronous>, transform_indices = @transform_1, window_bounds = array<i64: 64, 32>}, {pipeline_mode = #tpu.pipeline_mode<synchronous>, transform_indices = @transform_2, window_bounds = array<i64: 1, 32>}, {transform_indices = @transform_3, window_bounds = array<i64: 32, 32>}]} {
    %c0 = arith.constant 0 : index
    %c0_0 = arith.constant 0 : index
    %0 = vector.load %arg1[%c0, %c0_0] : memref<32x64xbf16, #tpu.memory_space<vmem>>, vector<32x64xbf16>
    %c0_1 = arith.constant 0 : index
    %c0_2 = arith.constant 0 : index
    %1 = vector.load %arg2[%c0_1, %c0_2] : memref<64x32xbf16, #tpu.memory_space<vmem>>, vector<64x32xbf16>
    %cst = arith.constant dense<0.000000e+00> : vector<32x32xf32>
    %2 = tpu.matmul %0, %1, %cst {dimension_numbers = #tpu.dot_dimension_numbers<[1], [0], [0], [1], [0, 0, 1, 1], [], []>} : vector<32x64xbf16>, vector<64x32xbf16>, vector<32x32xf32> -> vector<32x32xf32>
    %c0_3 = arith.constant 0 : index
    %c0_4 = arith.constant 0 : index
    %3 = vector.load %arg3[%c0_3, %c0_4] : memref<1x32xf32, #tpu.memory_space<vmem>>, vector<1x32xf32>
    %4 = vector.broadcast %3 : vector<1x32xf32> to vector<32x32xf32>
    %5 = arith.addf %2, %4 : vector<32x32xf32>
    %c0_5 = arith.constant 0 : index
    %c0_6 = arith.constant 0 : index
    %6 = vector.load %arg4[%c0_5, %c0_6] : memref<32x32xf32, #tpu.memory_space<vmem>>, vector<32x32xf32>
    tpu.vector_store %arg4[%c0_5, %c0_6], %5 {strides = array<i32>} : memref<32x32xf32, #tpu.memory_space<vmem>>, vector<32x32xf32>,
    return
  }
  func.func @transform_0(%arg0: i32) -> (i32, i32) {
    %c0_i32 = arith.constant 0 : i32
    %c0_i32_0 = arith.constant 0 : i32
    return %arg0, %c0_i32 : i32, i32
  }
  func.func @transform_1(%arg0: i32) -> (i32, i32) {
    %c0_i32 = arith.constant 0 : i32
    %c0_i32_0 = arith.constant 0 : i32
    %c0_i32_1 = arith.constant 0 : i32
    return %c0_i32, %c0_i32_0 : i32, i32
  }
  func.func @transform_2(%arg0: i32) -> (i32, i32) {
    %c0_i32 = arith.constant 0 : i32
    %c0_i32_0 = arith.constant 0 : i32
    %c0_i32_1 = arith.constant 0 : i32
    return %c0_i32, %c0_i32_0 : i32, i32
  }
  func.func @transform_3(%arg0: i32) -> (i32, i32) {
    %c0_i32 = arith.constant 0 : i32
    %c0_i32_0 = arith.constant 0 : i32
    return %arg0, %c0_i32 : i32, i32
  }
}

</mosaic_0001>

<llo_original>
// kernel: patch_embed_forward.1
$region0: #{patch_embed_forward.1}
  #allocation0 [shape = 'u32[]', space=smem, size = 0x4, offset = 0x4, fixed_abs, tag = 'smem constant byte address 0x4 - core index']
  #allocation1 [shape = 'u32[144,128]{1,0:T(1,128)}', space=vmem, size = 0x12000, scoped, tag = 'internal scratch']
  %s0 = inlined_call_operand.vmem [shape: bf16[32,64], index: 0, kind: input, shape index: {}]
  %s1 = inlined_call_operand.vmem [shape: bf16[64,32], index: 1, kind: input, shape index: {}]
  %s2 = inlined_call_operand.vmem [shape: f32[1,32], index: 2, kind: input, shape index: {}]
  %s3 = inlined_call_operand.hbm [shape: f32[32,32], index: 3, kind: output, shape index: {}]
  %s4 = sld [smem:[#allocation0]]
  $region22: #{patch_embed_forward.1} parent=0
    _
  %s6 = ssub.s32 1, %s4
  %s7 = scalar_select 0, %s6, %s4
  $region1: #{patch_embed_forward.1} parent=0
    #allocation2 [shape = 'u8[16384]{0}', space=vmem, size = 0x4000, scoped, tag = 'output window, operand 0, single buffered']
    #allocation3 [shape = 's32[1]{0}', space=sflag, size = 0x4, scoped, tag = 'scoped memory for patch_embed_forward.1']
    %8 = vsyncpa [#allocation3], 0
    // Predicated region
    $region2: #{patch_embed_forward.1} parent=1 // pred_check
      _
    $region3: #{patch_embed_forward.1} parent=1 // pred_check_branch
      %10 = sbr.rel (0) target = $region5
    $region4: #{patch_embed_forward.1} parent=1 // pred_region
      _
    $region5: #{patch_embed_forward.1} parent=1 // pred_fallthru
      _
    // Predicated region
    $region6: #{patch_embed_forward.1} parent=1 // pred_check
      _
    $region7: #{patch_embed_forward.1} parent=1 // pred_check_branch
      %12 = sbr.rel (0) target = $region9
    $region8: #{patch_embed_forward.1} parent=1 // pred_region
      _
    $region9: #{patch_embed_forward.1} parent=1 // pred_fallthru
      _
    // Predicated region
    $region10: #{patch_embed_forward.1} parent=1 // pred_check
      _
    $region11: #{patch_embed_forward.1} parent=1 // pred_check_branch
      %14 = sbr.rel (0) target = $region13
    $region12: #{patch_embed_forward.1} parent=1 // pred_region
      _
    $region13: #{patch_embed_forward.1} parent=1 // pred_fallthru
      _
    %v16 = vld [vmem:[%s0] sm:$0xf]
    %v17 = vld [vmem:[%s0 + $0x4] sm:$0xf]
    %v18 = vld [vmem:[%s0 + $0x8] sm:$0xf]
    %v19 = vld [vmem:[%s0 + $0xc] sm:$0xf]
    %v20 = vld [vmem:[%s1] sm:$0xf]
    %v21 = vld [vmem:[%s1 + $0x4] sm:$0xf]
    %v22 = vld [vmem:[%s1 + $0x8] sm:$0xf]
    %v23 = vld [vmem:[%s1 + $0xc] sm:$0xf]
    %v24 = vld [vmem:[%s1 + $0x10] sm:$0xf]
    %v25 = vld [vmem:[%s1 + $0x14] sm:$0xf]
    %v26 = vld [vmem:[%s1 + $0x18] sm:$0xf]
    %v27 = vld [vmem:[%s1 + $0x1c] sm:$0xf]
    %v28 = vld [vmem:[%s2] sm:$0x1]
    %v30 = vlaneseq
    %v31 = vshrl.u32 %v30, 7
    %v32 = vsub.s32 0, %v31
    %v33 = vrot.slane %v28, %v32
    %v39 = vunpack.c.l.b16 %v16
    %v40 = vunpack.c.l.b16 %v17
    %v41 = vunpack.c.l.b16 %v18
    %v42 = vunpack.c.l.b16 %v19
    %v43 = vpack.c.b16 %v40, %v39
    %v44 = vpack.c.b16 %v42, %v41
    %v53 = vunpack.c.l.b16 %v20
    %v54 = vunpack.c.l.b16 %v21
    %v55 = vunpack.c.l.b16 %v22
    %v56 = vunpack.c.l.b16 %v23
    %v57 = vunpack.c.l.b16 %v24
    %v58 = vunpack.c.l.b16 %v25
    %v59 = vunpack.c.l.b16 %v26
    %v60 = vunpack.c.l.b16 %v27
    %v61 = vpack.c.b16 %v54, %v53
    %v62 = vpack.c.b16 %v56, %v55
    %v63 = vpack.c.b16 %v58, %v57
    %v64 = vpack.c.b16 %v60, %v59
    %vm69 = vcmask 523264
    %v71 = vsel %vm69, %v43, 0
    %v74 = vsel %vm69, %v44, 0
    %76 = vmatprep.subr.bf16.mxu0 0
    %77 = vmatpush1.bf16.msra.mxu0 0
    %78 = vmatprep.subr.bf16.mxu0 0
    %79 = vmatpush1.bf16.msra.mxu0 0
    %80 = vmatprep.subr.bf16.mxu0 0
    %81 = vmatpush1.bf16.msra.mxu0 0
    %82 = vmatprep.subr.bf16.mxu0 0
    %83 = vmatpush1.bf16.msra.mxu0 0
    %84 = vmatprep.subr.bf16.mxu0 0
    %85 = vmatpush1.bf16.msra.mxu0 %v64
    %86 = vmatprep.subr.bf16.mxu0 0
    %87 = vmatpush1.bf16.msra.mxu0 %v63
    %88 = vmatprep.subr.bf16.mxu0 0
    %89 = vmatpush1.bf16.msra.mxu0 %v62
    %90 = vmatprep.subr.bf16.mxu0 0
    %91 = vmatpush1.bf16.msra.mxu0 %v61
    %92 = vmatprep.subr.bf16.mxu0 0
    %93 = vmatpush2.bf16.msra.mxu0 0
    %94 = vmatprep.subr.bf16.mxu0 0
    %95 = vmatpush2.bf16.msra.mxu0 0
    %96 = vmatprep.subr.bf16.mxu0 0
    %97 = vmatpush2.bf16.msra.mxu0 0
    %98 = vmatprep.subr.bf16.mxu0 0
    %99 = vmatpush2.bf16.msra.mxu0 0
    %100 = vmatprep.subr.bf16.mxu0 0
    %101 = vmatpush2.bf16.msra.mxu0 0
    %102 = vmatprep.subr.bf16.mxu0 0
    %103 = vmatpush2.bf16.msra.mxu0 0
    %104 = vmatprep.subr.bf16.mxu0 0
    %105 = vmatpush2.bf16.msra.mxu0 0
    %106 = vmatprep.subr.bf16.mxu0 0
    %107 = vmatpush2.bf16.msra.mxu0 0
    %108 = vmatprep.mubr.bf16.mxu0 0
    %109 = vmatmul.mubr.bf16.gmra.mxu0 %v71
    %v110 = vpop.f32.mrf.mxu0
    %v111 = vadd.f32 %v33, %v110
    %v112 = vpop.f32.mrf.mxu0
    %v113 = vpop.f32.mrf.mxu0
    %v114 = vadd.f32 %v33, %v113
    %v115 = vpop.f32.mrf.mxu0
    %116 = vmatprep.mubr.bf16.mxu0 0
    %117 = vmatmul.mubr.bf16.gmra.mxu0 %v74
    %v118 = vpop.f32.mrf.mxu0
    %v119 = vadd.f32 %v33, %v118
    %v120 = vpop.f32.mrf.mxu0
    %v121 = vpop.f32.mrf.mxu0
    %v122 = vadd.f32 %v33, %v121
    %v123 = vpop.f32.mrf.mxu0
    %124 = vdwg.mxu0
    %vm125 = vcmask 261120
    %126 = vst.msk [vmem:[#allocation2] sm:$0xff] %vm125, %v111
    %127 = vst.msk [vmem:[#allocation2 + $0x8] sm:$0xff] %vm125, %v114
    %128 = vst.msk [vmem:[#allocation2 + $0x10] sm:$0xff] %vm125, %v119
    %129 = vst.msk [vmem:[#allocation2 + $0x18] sm:$0xff] %vm125, %v122
    // Predicated region
    $region14: #{patch_embed_forward.1} parent=1 // pred_check
      _
    $region15: #{patch_embed_forward.1} parent=1 // pred_check_branch
      %131 = sbr.rel (0) target = $region17
    $region16: #{patch_embed_forward.1} parent=1 // pred_region
      %s133 = ssub.s32 512, 512
      %134 = vsyncadd [#allocation3], %s133
      %s135 = sshll.u32 [#allocation2], 4
      %s136 = int_to_ptr.vmem [resolvable:$true] %s135
      %141 = dma.vmem_to_hbm [thread:$0]  %s136, 512, %s3, [#allocation3], 128, 128, 8
    $region17: #{patch_embed_forward.1} parent=1 // pred_fallthru
      _
    // Predicated region
    $region18: #{patch_embed_forward.1} parent=1 // pred_check
      _
    $region19: #{patch_embed_forward.1} parent=1 // pred_check_branch
      %143 = sbr.rel (0) target = $region21
    $region20: #{patch_embed_forward.1} parent=1 // pred_region
      %144 = dma.done [#allocation3], 512
    $region21: #{patch_embed_forward.1} parent=1 // pred_fallthru
      _
    %145 = vsyncpa [#allocation3], 1

</llo_original>
